<compile_context>
chip_gen: v7x
topology: tpu7x:2x2x1
jax: 0.10.0
libtpu: 0.0.40
codegen_flags: <defaults>
</compile_context>

<pallas_src>
import functools

import jax
import jax.numpy as jnp
from jax import lax
from jax.experimental import pallas as pl
from jax.experimental.pallas import tpu as pltpu

TARGET_BLOCK_BYTES = 8 * 1024 * 1024   # ~8 MiB input blocks hit the HBM roofline
MAX_HW_TILE = 16384                    # collapse the reduction axis when hw fits
DEFAULT_HW_TILE = 8192                 # split tile for very large hw (mult. of 128)


def _round_up(x, m):
    return (x + m - 1) // m * m


def _clamped_pow(x, p_ref, eps, static_p):
    """clamp(x, eps) ** p, upcast to f32."""
    x = jnp.maximum(x.astype(jnp.float32), eps)
    if static_p is not None:
        # Integer exponent: exponentiation by squaring, pure VPU, zero EUP ops.
        e = int(static_p)
        result, base = None, x
        while e > 0:
            if e & 1:
                result = base if result is None else result * base
            e >>= 1
            if e:
                base = base * base
        return result
    p = p_ref[0]
    return jnp.exp(p * jnp.log(x))       # x ** p on the strictly positive domain


def _finalize(total, p_ref, hw_true, static_p, out_dtype):
    mean = total * (1.0 / hw_true)
    inv_p = (1.0 / float(static_p)) if static_p is not None else (1.0 / p_ref[0])
    return jnp.exp(jnp.log(mean) * inv_p).astype(out_dtype)


def gem_kernel_single(p_ref, x_ref, o_ref, *, eps, hw_true, static_p):
    # Whole hw extent in one block: no accumulator, no mask needed.
    xp = _clamped_pow(x_ref[...], p_ref, eps, static_p)
    total = jnp.sum(xp, axis=-1, keepdims=True)
    o_ref[...] = _finalize(total, p_ref, hw_true, static_p, o_ref.dtype)


def gem_kernel_multi(p_ref, x_ref, o_ref, acc_ref, *, eps, hw_true, thw, static_p):
    # hw is split across grid axis 1; acc_ref is a lane-dense (tr, 128) f32
    # scratch persistent across that axis.
    k = pl.program_id(1)
    last = pl.num_programs(1) - 1

    @pl.when(k == 0)
    def _():
        acc_ref[...] = jnp.zeros_like(acc_ref)

    xp = _clamped_pow(x_ref[...], p_ref, eps, static_p)

    def accumulate(vals):
        # Fold the thw/128 lane groups with pairwise element-wise VPU adds;
        # the cross-lane XLU reduce is deferred to the finalize step.
        chunks = [vals[:, j * 128:(j + 1) * 128] for j in range(thw // 128)]
        while len(chunks) > 1:
            nxt = [chunks[i] + chunks[i + 1] for i in range(0, len(chunks) - 1, 2)]
            if len(chunks) % 2:
                nxt.append(chunks[-1])
            chunks = nxt
        acc_ref[...] += chunks[0]

    if (hw_true % thw) != 0:
        # Only the final hw tile has out-of-bounds garbage lanes; mask them
        # there (and only there) so NaN/Inf never reaches the accumulator.
        @pl.when(k != last)
        def _():
            accumulate(xp)

        @pl.when(k == last)
        def _():
            col = lax.broadcasted_iota(jnp.int32, xp.shape, 1)
            valid = col < (hw_true - k * thw)
            accumulate(jnp.where(valid, xp, 0.0))
    else:
        accumulate(xp)

    @pl.when(k == last)
    def _():
        total = jnp.sum(acc_ref[...], axis=-1, keepdims=True)
        o_ref[...] = _finalize(total, p_ref, hw_true, static_p, o_ref.dtype)


def gem(x, p, eps=1e-6, *, static_p=None, hw_tile=None):
    """Generalized-mean pooling.  x: (N, C, H, W), p: (1,) f32 -> (N, C, 1, 1).

    static_p: optional Python int; when given, x**p uses pure-VPU multiplies.
    hw_tile:  optional override of the hw split tile (multiple of 128); mainly
              for testing the multi-step reduction path on small inputs.
    """
    N, C, H, W = x.shape
    rows, hw = N * C, H * W
    x2 = x.reshape(rows, hw)
    itemsize = jnp.dtype(x.dtype).itemsize

    if static_p is not None:
        assert int(static_p) == static_p and static_p >= 1, "static_p must be a positive int"
        static_p = int(static_p)

    # ---- tile selection -------------------------------------------------
    sub = max(8, 32 // itemsize)                       # 8 for f32, 16 for bf16
    collapse_limit = MAX_HW_TILE if hw_tile is None else hw_tile
    if hw <= collapse_limit:
        thw = hw                                       # single reduction step
    else:
        thw = hw_tile if hw_tile is not None else DEFAULT_HW_TILE
        assert thw % 128 == 0

    rows_aligned = _round_up(rows, sub)
    tr = TARGET_BLOCK_BYTES // max(thw * itemsize, 1)
    tr = max(sub, (tr // sub) * sub)
    # keep >= ~8 row tiles so the "parallel" axis can spread over v7x's two TCs
    tr = min(tr, max(sub, _round_up(pl.cdiv(rows_aligned, 8), sub)))
    tr = min(tr, rows_aligned)

    grid = (pl.cdiv(rows, tr), pl.cdiv(hw, thw))
    single_step = grid[1] == 1

    if single_step:
        kernel = functools.partial(
            gem_kernel_single, eps=eps, hw_true=hw, static_p=static_p)
        scratch = []
    else:
        kernel = functools.partial(
            gem_kernel_multi, eps=eps, hw_true=hw, thw=thw, static_p=static_p)
        scratch = [pltpu.VMEM((tr, 128), jnp.float32)]

    # ---- cost / vmem hints ----------------------------------------------
    trans = (0 if static_p is not None else 2 * rows * hw) + 2 * rows
    cost = pl.CostEstimate(
        flops=6 * rows * hw,
        transcendentals=trans,
        bytes_accessed=rows * hw * itemsize + rows * itemsize,
    )
    block_bytes = tr * thw * itemsize
    vmem_limit = min(max(4 * block_bytes, 16 * 1024 * 1024), 48 * 1024 * 1024)

    out = pl.pallas_call(
        kernel,
        out_shape=jax.ShapeDtypeStruct((rows, 1), x.dtype),
        grid=grid,
        in_specs=[
            pl.BlockSpec(memory_space=pltpu.MemorySpace.SMEM),   # p (scalar)
            pl.BlockSpec((tr, thw), lambda i, k: (i, k)),        # x tile
        ],
        out_specs=pl.BlockSpec((tr, 1), lambda i, k: (i, 0)),
        scratch_shapes=scratch,
        compiler_params=pltpu.CompilerParams(
            dimension_semantics=("parallel", "arbitrary"),
            vmem_limit_bytes=vmem_limit,
        ),
        cost_estimate=cost,
    )(p.astype(jnp.float32).reshape(1), x2)

    return out.reshape(N, C, 1, 1)


if __name__ == "__main__":
    key = jax.random.PRNGKey(0)

    def reference(x, p, eps):
        xr = jnp.maximum(x, eps) ** p[0]
        return jnp.mean(xr, axis=(-2, -1), keepdims=True) ** (1.0 / p[0])

    # Deterministic parameter init, matching nn.Parameter(torch.ones(1) * 3).
    p = jnp.ones((1,), dtype=jnp.float32) * 3.0
    eps = 1e-6

    # Primary: module-sized input, learned-p path (single reduction step).
    N, C, H, W = 2, 4, 16, 16
    x = jax.random.normal(key, (N, C, H, W), dtype=jnp.float32)
    y = gem(x, p, eps)
    jax.block_until_ready(y)
    ref = reference(x, p, eps)
    assert y.shape == (N, C, 1, 1)
    assert jnp.allclose(y, ref, rtol=1e-4, atol=1e-5)

    # Coverage: multi-step reduction with a ragged (masked) final hw tile.
    x2 = jax.random.normal(jax.random.PRNGKey(1), (2, 4, 13, 13), dtype=jnp.float32)
    y2 = gem(x2, p, eps, hw_tile=128)
    jax.block_until_ready(y2)
    assert jnp.allclose(y2, reference(x2, p, eps), rtol=1e-4, atol=1e-5)

    # Coverage: static integer-p fast path (no transcendentals in inner loop).
    y3 = gem(x, p, eps, static_p=3)
    jax.block_until_ready(y3)
    assert jnp.allclose(y3, ref, rtol=1e-4, atol=1e-5)

    print("KERNEL_OK")
</pallas_src>

<mosaic_0001>
module attributes {stable_mosaic.version = 11 : i64} {
  func.func @gem_kernel_single(%arg0: i32, %arg1: i32, %arg2: memref<1xf32, #tpu.memory_space<smem>>, %arg3: memref<8x256xf32, #tpu.memory_space<vmem>>, %arg4: memref<8x1xf32, #tpu.memory_space<vmem>>) attributes {dimension_semantics = [#tpu.dimension_semantics<parallel>, #tpu.dimension_semantics<arbitrary>], iteration_bounds = array<i64: 1, 1>, scalar_prefetch = 0 : i64, scratch_operands = 0 : i64, tpu.core_type = #tpu.core_type<tc>, window_params = [{transform_indices = @transform_0, window_bounds = array<i64: 1>}, {transform_indices = @transform_1, window_bounds = array<i64: 8, 256>}, {transform_indices = @transform_2, window_bounds = array<i64: 8, 1>}]} {
    %c0 = arith.constant 0 : index
    %c0_0 = arith.constant 0 : index
    %0 = vector.load %arg3[%c0, %c0_0] : memref<8x256xf32, #tpu.memory_space<vmem>>, vector<8x256xf32>
    %cst = arith.constant 9.99999997E-7 : f32
    %1 = vector.broadcast %cst : f32 to vector<8x256xf32>
    %2 = arith.maximumf %0, %1 : vector<8x256xf32>
    %c0_1 = arith.constant 0 : index
    %3 = memref.load %arg2[%c0_1] : memref<1xf32, #tpu.memory_space<smem>>
    %4 = math.log %2 : vector<8x256xf32>
    %5 = vector.broadcast %3 : f32 to vector<8x256xf32>
    %6 = arith.mulf %5, %4 : vector<8x256xf32>
    %7 = math.exp %6 : vector<8x256xf32>
    %cst_2 = arith.constant dense<0.000000e+00> : vector<8xf32>
    %8 = vector.multi_reduction <add>, %7, %cst_2 [1] : vector<8x256xf32> to vector<8xf32>
    %9 = vector.shape_cast %8 : vector<8xf32> to vector<8x1xf32>
    %cst_3 = arith.constant 3.906250e-03 : f32
    %10 = vector.broadcast %cst_3 : f32 to vector<8x1xf32>
    %11 = arith.mulf %9, %10 : vector<8x1xf32>
    %c0_4 = arith.constant 0 : index
    %12 = memref.load %arg2[%c0_4] : memref<1xf32, #tpu.memory_space<smem>>
    %cst_5 = arith.constant 1.000000e+00 : f32
    %13 = arith.divf %cst_5, %12 : f32
    %14 = math.log %11 : vector<8x1xf32>
    %15 = vector.broadcast %13 : f32 to vector<8x1xf32>
    %16 = arith.mulf %14, %15 : vector<8x1xf32>
    %17 = math.exp %16 : vector<8x1xf32>
    %c0_6 = arith.constant 0 : index
    %c0_7 = arith.constant 0 : index
    %18 = vector.load %arg4[%c0_6, %c0_7] : memref<8x1xf32, #tpu.memory_space<vmem>>, vector<8x1xf32>
    tpu.vector_store %arg4[%c0_6, %c0_7], %17 {strides = array<i32>} : memref<8x1xf32, #tpu.memory_space<vmem>>, vector<8x1xf32>,
    return
  }
  func.func @transform_0(%arg0: i32, %arg1: i32) -> i32 {
    %c0_i32 = arith.constant 0 : i32
    %c0_i32_0 = arith.constant 0 : i32
    return %c0_i32 : i32
  }
  func.func @transform_1(%arg0: i32, %arg1: i32) -> (i32, i32) {
    %c0_i32 = arith.constant 0 : i32
    return %arg0, %arg1 : i32, i32
  }
  func.func @transform_2(%arg0: i32, %arg1: i32) -> (i32, i32) {
    %c0_i32 = arith.constant 0 : i32
    %c0_i32_0 = arith.constant 0 : i32
    return %arg0, %c0_i32 : i32, i32
  }
}

</mosaic_0001>

<llo_original>
// kernel: tpu_custom_call.1
$region0: #{tpu_custom_call.1}
  #allocation0 [shape = 'u32[]', space=smem, size = 0x4, offset = 0x4, fixed_abs, tag = 'smem constant byte address 0x4 - core index']
  #allocation1 [shape = 'u32[144,128]{1,0:T(1,128)}', space=vmem, size = 0x12000, scoped, tag = 'internal scratch']
  #allocation2 [shape = 'f32[1]{0:T(128)S(6)}', space=smem, size = 0x200, scoped, tag = 'scoped memory for tpu_custom_call.1']
  %s0 = inlined_call_operand.<no memory space> [shape: f32[1], index: 0, kind: input, shape index: {}]
  %s1 = inlined_call_operand.hbm [shape: f32[8,256], index: 1, kind: input, shape index: {}]
  %s2 = inlined_call_operand.vmem [shape: f32[8,1], index: 2, kind: output, shape index: {}]
  %s3 = sld [smem:[#allocation0]]
  $region22: #{tpu_custom_call.1} parent=0
    _
  %s5 = ssub.s32 1, %s3
  %s6 = scalar_select 0, %s5, %s3
  %7 = sst [smem:[#allocation2]] %s0
  $region1: #{tpu_custom_call.1} parent=0
    #allocation3 [shape = 'u8[8192]{0}', space=vmem, size = 0x2000, scoped, tag = 'input window, operand 1, single buffered']
    #allocation4 [shape = 's32[1]{0}', space=sflag, size = 0x4, scoped, tag = 'scoped memory for tpu_custom_call.1']
    %8 = vsyncpa [#allocation4], 0
    // Predicated region
    $region2: #{tpu_custom_call.1} parent=1 // pred_check
      _
    $region3: #{tpu_custom_call.1} parent=1 // pred_check_branch
      %10 = sbr.rel (0) target = $region5
    $region4: #{tpu_custom_call.1} parent=1 // pred_region
      _
    $region5: #{tpu_custom_call.1} parent=1 // pred_fallthru
      _
    // Predicated region
    $region6: #{tpu_custom_call.1} parent=1 // pred_check
      _
    $region7: #{tpu_custom_call.1} parent=1 // pred_check_branch
      %12 = sbr.rel (0) target = $region9
    $region8: #{tpu_custom_call.1} parent=1 // pred_region
      %s14 = ssub.s32 256, 256
      %15 = vsyncadd [#allocation4], %s14
      %s17 = sshll.u32 [#allocation3], 4
      %s18 = int_to_ptr.vmem [resolvable:$true] %s17
      %20 = dma.hbm_to_vmem [thread:$0]  %s1, 256, %s18, [#allocation4]
    $region9: #{tpu_custom_call.1} parent=1 // pred_fallthru
      _
    // Predicated region
    $region10: #{tpu_custom_call.1} parent=1 // pred_check
      _
    $region11: #{tpu_custom_call.1} parent=1 // pred_check_branch
      %22 = sbr.rel (0) target = $region13
    $region12: #{tpu_custom_call.1} parent=1 // pred_region
      %23 = dma.done [#allocation4], 256
    $region13: #{tpu_custom_call.1} parent=1 // pred_fallthru
      _
    %v24 = vld [vmem:[#allocation3] sm:$0xff]
    %v25 = vld [vmem:[#allocation3 + $0x8] sm:$0xff]
    %v26 = vmax.f32 %v24, 1e-06
    %v27 = vmax.f32 %v25, 1e-06
    %s28 = sld [smem:[#allocation2]]
    %v29 = vlog2.pop %v26
    %v30 = vmul.f32 %v29, 0.6931472
    %v31 = vlog2.pop %v27
    %v32 = vmul.f32 %v31, 0.6931472
    %v33 = vstv %s28
    %v34 = vmul.f32 %v33, %v30
    %v35 = vmul.f32 %v33, %v32
    %v36 = vmul.f32 %v34, 1.442695
    %v37 = vpow.pop %v36
    %v38 = vmul.f32 %v35, 1.442695
    %v39 = vpow.pop %v38
    %v40 = vadd.f32 %v37, %v39
    %41 = vadd.xlane.f32.xlu0 %v40
    %v42 = vpop.xlane.xlu0 %41
    %v43 = vmul.f32 %v42, 0.00390625
    %v44 = vstv %s28
    %v45 = vrcp.pop %v44
    %s46 = vtos %v45
    %v47 = vlog2.pop %v43
    %v48 = vmul.f32 %v47, 0.6931472
    %v49 = vstv %s46
    %v50 = vmul.f32 %v48, %v49
    %v51 = vmul.f32 %v50, 1.442695
    %v52 = vpow.pop %v51
    %vm53 = vcmask 7168
    %54 = vst.msk [vmem:[%s2] sm:$0xff] %vm53, %v52
    // Predicated region
    $region14: #{tpu_custom_call.1} parent=1 // pred_check
      _
    $region15: #{tpu_custom_call.1} parent=1 // pred_check_branch
      %56 = sbr.rel (0) target = $region17
    $region16: #{tpu_custom_call.1} parent=1 // pred_region
      _
    $region17: #{tpu_custom_call.1} parent=1 // pred_fallthru
      _
    // Predicated region
    $region18: #{tpu_custom_call.1} parent=1 // pred_check
      _
    $region19: #{tpu_custom_call.1} parent=1 // pred_check_branch
      %58 = sbr.rel (0) target = $region21
    $region20: #{tpu_custom_call.1} parent=1 // pred_region
      _
    $region21: #{tpu_custom_call.1} parent=1 // pred_fallthru
      _
    %59 = vsyncpa [#allocation4], 1

</llo_original>
